<compile_context>
chip_gen: v7x
topology: tpu7x:2x2x1
jax: 0.10.0
libtpu: 0.0.40
codegen_flags: <defaults>
</compile_context>

<pallas_src>
import functools
import math

import jax
import jax.numpy as jnp
from jax.experimental import pallas as pl
from jax.experimental.pallas import tpu as pltpu

_LANES = 128
# Output tile byte budget (f32).  2 MiB keeps the double-buffered output plus
# the two resident (tr, L) local-trig inputs within v5e's 16 MiB default
# scoped VMEM (2*2 + 2*2*2 = 12 MiB) while amortizing per-step overhead.
_TILE_BYTES = 2 * 1024 * 1024


def _round_up8(n):
    return -(-n // 8) * 8


def _pe_kernel(inv_freq_ref, parity_ref, lsin_ref, lcos_ref, o_ref, *,
               pos_per_block):
    """One (tr, L) slab of the flattened PE table.

    angle(pos, dim) = pos * inv_freq(dim); even dims take sin, odd dims cos.
    pos = base + local with base = program_id * pos_per_block.  Using
      sin(b + l) = sin b * cos l + cos b * sin l
      cos(b + l) = cos b * cos l - sin b * sin l
    the per-element work is 2 mul + 1 add; sin/cos of the local angles is a
    VMEM-resident input and only a (1, L) sin/cos runs per grid step.
    """
    base = (pl.program_id(0) * pos_per_block).astype(jnp.float32)
    b_angle = base * inv_freq_ref[...]          # (1, L)
    bs = jnp.sin(b_angle)
    bc = jnp.cos(b_angle)
    odd = parity_ref[...]                       # (1, L), 0. for even dim, 1. for odd
    p = bs + odd * (bc - bs)                    # sin b (even) | cos b  (odd)
    q = bc - odd * (bc + bs)                    # cos b (even) | -sin b (odd)
    o_ref[...] = (p * lcos_ref[...] + q * lsin_ref[...]).astype(o_ref.dtype)


def _build_pe_2d(seq_len, d_model, dtype):
    """(seq_len, d_model) sinusoidal table, generated as a lane-dense slab."""
    # Lane-dense slab: rows of L = lcm(d_model, 128) lanes -> unmasked vst.
    L = math.lcm(d_model, _LANES)
    per_row = L // d_model
    if seq_len % per_row != 0:
        # Fallback: row-major slab (masked stores only if d_model % 128 != 0).
        L, per_row = d_model, 1
    rows = seq_len // per_row

    # Byte-capped row tile; also cap at ceil(rows/2) so the grid has >= 2 steps
    # whenever possible (lets "parallel" use both TensorCores on v7x; a
    # harmless sequential loop on single-TC v5e/v6e).
    cap = max(8, (_TILE_BYTES // (L * 4)) // 8 * 8)
    if rows >= 16:
        cap = min(cap, _round_up8(-(-rows // 2)))
    tr = min(cap, rows)
    grid = (pl.cdiv(rows, tr),)

    # Per-column quantities (hoisted; passed as VMEM-resident inputs).
    lane = jnp.arange(L, dtype=jnp.int32)
    dim = lane % d_model
    pos_in_row = (lane // d_model).astype(jnp.float32)
    inv_freq = jnp.exp((dim // 2).astype(jnp.float32)
                       * jnp.float32(-2.0 * math.log(10000.0) / d_model))
    parity = (dim % 2).astype(jnp.float32)
    # Local-angle sin/cos for one tile: identical for every grid step, so it is
    # computed once here and stays resident (index_map always returns (0, 0)).
    local_pos = (jnp.arange(tr, dtype=jnp.float32)[:, None] * jnp.float32(per_row)
                 + pos_in_row[None, :])
    local_angle = local_pos * inv_freq[None, :]
    local_sin = jnp.sin(local_angle)
    local_cos = jnp.cos(local_angle)

    flat = pl.pallas_call(
        functools.partial(_pe_kernel, pos_per_block=tr * per_row),
        out_shape=jax.ShapeDtypeStruct((rows, L), dtype),
        grid=grid,
        in_specs=[
            pl.BlockSpec((1, L), lambda i: (0, 0)),    # inv_freq
            pl.BlockSpec((1, L), lambda i: (0, 0)),    # parity
            pl.BlockSpec((tr, L), lambda i: (0, 0)),   # local sin (resident)
            pl.BlockSpec((tr, L), lambda i: (0, 0)),   # local cos (resident)
        ],
        out_specs=pl.BlockSpec((tr, L), lambda i: (i, 0)),
        compiler_params=pltpu.CompilerParams(
            dimension_semantics=("parallel",)),
    )(inv_freq[None, :], parity[None, :], local_sin, local_cos)
    return flat.reshape(seq_len, d_model)


@functools.lru_cache(maxsize=None)
def _cached_pe_table(max_len, d_model, dtype_name):
    pe2d = _build_pe_2d(max_len, d_model, jnp.dtype(dtype_name))
    return jax.block_until_ready(pe2d[None])   # (1, max_len, d_model)


class PositionEncoding:
    """JAX/Pallas equivalent of the PyTorch PositionEncoding module."""

    def __init__(self, d_model=512, max_len=5000, dtype=jnp.float32):
        # Built once with the Pallas kernel and cached (like the torch
        # registered buffer); forward() never regenerates the table.
        self.pe = _cached_pe_table(max_len, d_model, jnp.dtype(dtype).name)

    def __call__(self, x):
        # forward(x) -> pe[:, :x.shape[1]], shape (1, seq, d_model)
        return self.pe[:, : x.shape[1]]

    # TODO(synk): for end-to-end peak perf, fuse the cached table into the
    # downstream `x + pe` add (removes a full HBM round trip); kept separate
    # here to preserve the module's forward semantics (returns pe only).


def _reference(seq_len, d_model):
    """Pure-JAX reference mirroring the PyTorch buffer construction."""
    position = jnp.arange(seq_len, dtype=jnp.float32)[:, None]
    div_term = jnp.exp(jnp.arange(0, d_model, 2, dtype=jnp.float32)
                       * jnp.float32(-(math.log(10000.0) / d_model)))
    pe = jnp.zeros((seq_len, d_model), jnp.float32)
    pe = pe.at[:, 0::2].set(jnp.sin(position * div_term))
    pe = pe.at[:, 1::2].set(jnp.cos(position * div_term))
    return pe[None]


if __name__ == "__main__":
    key = jax.random.PRNGKey(0)

    def check(d_model, max_len, seq, batch=2):
        enc = PositionEncoding(d_model=d_model, max_len=max_len)
        x = jax.random.normal(key, (batch, seq, d_model), dtype=jnp.float32)
        out = jax.block_until_ready(enc(x))
        assert out.shape == (1, seq, d_model), out.shape
        ref = _reference(max_len, d_model)
        # forward slice (small positions) -> tight tolerance
        assert jnp.allclose(out, ref[:, :seq], atol=1e-5, rtol=1e-5), \
            (d_model, "forward mismatch")
        # full table: tolerance reflects f32 rounding of angles ~ max_len rad
        # (the reference carries the same-order rounding of pos*div_term).
        assert jnp.allclose(enc.pe, ref, atol=5e-4, rtol=1e-4), \
            (d_model, "table mismatch")

    check(d_model=32, max_len=512, seq=8)     # lane-dense slab, L=128, 4 pos/row
    check(d_model=96, max_len=512, seq=8)     # LCM slab, L=384 (non-pow2 d_model)
    check(d_model=128, max_len=512, seq=16)   # d_model % 128 == 0 (row-major slab)
    print("KERNEL_OK")
</pallas_src>

<mosaic_0001>
module attributes {stable_mosaic.version = 11 : i64} {
  func.func @_pe_kernel(%arg0: i32, %arg1: memref<1x128xf32, #tpu.memory_space<vmem>>, %arg2: memref<1x128xf32, #tpu.memory_space<vmem>>, %arg3: memref<64x128xf32, #tpu.memory_space<vmem>>, %arg4: memref<64x128xf32, #tpu.memory_space<vmem>>, %arg5: memref<64x128xf32, #tpu.memory_space<vmem>>) attributes {dimension_semantics = [#tpu.dimension_semantics<parallel>], iteration_bounds = array<i64: 2>, scalar_prefetch = 0 : i64, scratch_operands = 0 : i64, tpu.core_type = #tpu.core_type<tc>, window_params = [{pipeline_mode = #tpu.pipeline_mode<synchronous>, transform_indices = @transform_0, window_bounds = array<i64: 1, 128>}, {pipeline_mode = #tpu.pipeline_mode<synchronous>, transform_indices = @transform_1, window_bounds = array<i64: 1, 128>}, {pipeline_mode = #tpu.pipeline_mode<synchronous>, transform_indices = @transform_2, window_bounds = array<i64: 64, 128>}, {pipeline_mode = #tpu.pipeline_mode<synchronous>, transform_indices = @transform_3, window_bounds = array<i64: 64, 128>}, {transform_indices = @transform_4, window_bounds = array<i64: 64, 128>}]} {
    %c256_i32 = arith.constant 256 : i32
    %0 = arith.muli %arg0, %c256_i32 : i32
    %1 = arith.sitofp %0 : i32 to f32
    %c0 = arith.constant 0 : index
    %c0_0 = arith.constant 0 : index
    %2 = vector.load %arg1[%c0, %c0_0] : memref<1x128xf32, #tpu.memory_space<vmem>>, vector<1x128xf32>
    %3 = vector.broadcast %1 : f32 to vector<1x128xf32>
    %4 = arith.mulf %3, %2 : vector<1x128xf32>
    %5 = math.sin %4 : vector<1x128xf32>
    %6 = math.cos %4 : vector<1x128xf32>
    %c0_1 = arith.constant 0 : index
    %c0_2 = arith.constant 0 : index
    %7 = vector.load %arg2[%c0_1, %c0_2] : memref<1x128xf32, #tpu.memory_space<vmem>>, vector<1x128xf32>
    %8 = arith.subf %6, %5 : vector<1x128xf32>
    %9 = arith.mulf %7, %8 : vector<1x128xf32>
    %10 = arith.addf %5, %9 : vector<1x128xf32>
    %11 = arith.addf %6, %5 : vector<1x128xf32>
    %12 = arith.mulf %7, %11 : vector<1x128xf32>
    %13 = arith.subf %6, %12 : vector<1x128xf32>
    %c0_3 = arith.constant 0 : index
    %c0_4 = arith.constant 0 : index
    %14 = vector.load %arg4[%c0_3, %c0_4] : memref<64x128xf32, #tpu.memory_space<vmem>>, vector<64x128xf32>
    %15 = vector.broadcast %10 : vector<1x128xf32> to vector<64x128xf32>
    %16 = arith.mulf %15, %14 : vector<64x128xf32>
    %c0_5 = arith.constant 0 : index
    %c0_6 = arith.constant 0 : index
    %17 = vector.load %arg3[%c0_5, %c0_6] : memref<64x128xf32, #tpu.memory_space<vmem>>, vector<64x128xf32>
    %18 = vector.broadcast %13 : vector<1x128xf32> to vector<64x128xf32>
    %19 = arith.mulf %18, %17 : vector<64x128xf32>
    %20 = arith.addf %16, %19 : vector<64x128xf32>
    %c0_7 = arith.constant 0 : index
    %c0_8 = arith.constant 0 : index
    %21 = vector.load %arg5[%c0_7, %c0_8] : memref<64x128xf32, #tpu.memory_space<vmem>>, vector<64x128xf32>
    tpu.vector_store %arg5[%c0_7, %c0_8], %20 {strides = array<i32>} : memref<64x128xf32, #tpu.memory_space<vmem>>, vector<64x128xf32>,
    return
  }
  func.func @transform_0(%arg0: i32) -> (i32, i32) {
    %c0_i32 = arith.constant 0 : i32
    %c0_i32_0 = arith.constant 0 : i32
    %c0_i32_1 = arith.constant 0 : i32
    return %c0_i32, %c0_i32_0 : i32, i32
  }
  func.func @transform_1(%arg0: i32) -> (i32, i32) {
    %c0_i32 = arith.constant 0 : i32
    %c0_i32_0 = arith.constant 0 : i32
    %c0_i32_1 = arith.constant 0 : i32
    return %c0_i32, %c0_i32_0 : i32, i32
  }
  func.func @transform_2(%arg0: i32) -> (i32, i32) {
    %c0_i32 = arith.constant 0 : i32
    %c0_i32_0 = arith.constant 0 : i32
    %c0_i32_1 = arith.constant 0 : i32
    return %c0_i32, %c0_i32_0 : i32, i32
  }
  func.func @transform_3(%arg0: i32) -> (i32, i32) {
    %c0_i32 = arith.constant 0 : i32
    %c0_i32_0 = arith.constant 0 : i32
    %c0_i32_1 = arith.constant 0 : i32
    return %c0_i32, %c0_i32_0 : i32, i32
  }
  func.func @transform_4(%arg0: i32) -> (i32, i32) {
    %c0_i32 = arith.constant 0 : i32
    %c0_i32_0 = arith.constant 0 : i32
    return %arg0, %c0_i32 : i32, i32
  }
}

</mosaic_0001>

<llo_original>
// kernel: tpu_custom_call.1
$region0: #{tpu_custom_call.1}
  #allocation0 [shape = 'u32[]', space=smem, size = 0x4, offset = 0x4, fixed_abs, tag = 'smem constant byte address 0x4 - core index']
  #allocation1 [shape = 'u32[144,128]{1,0:T(1,128)}', space=vmem, size = 0x12000, scoped, tag = 'internal scratch']
  %s0 = inlined_call_operand.hbm [shape: f32[1,128], index: 0, kind: input, shape index: {}]
  %s1 = inlined_call_operand.vmem [shape: f32[1,128], index: 1, kind: input, shape index: {}]
  %s2 = inlined_call_operand.hbm [shape: f32[64,128], index: 2, kind: input, shape index: {}]
  %s3 = inlined_call_operand.hbm [shape: f32[64,128], index: 3, kind: input, shape index: {}]
  %s4 = inlined_call_operand.hbm [shape: f32[128,128], index: 4, kind: output, shape index: {}]
  %s5 = sld [smem:[#allocation0]]
  $region61: #{tpu_custom_call.1} parent=0
    _
  %s7 = ssub.s32 1, %s5
  %s8 = scalar_select 0, %s7, %s5
  $region1: #{tpu_custom_call.1} parent=0
    #allocation2 [shape = 'u8[512]{0}', space=vmem, size = 0x400, scoped, tag = 'input window, operand 0, single buffered']
    #allocation3 [shape = 's32[2]{0}', space=sflag, size = 0x8, scoped, tag = 'scoped memory for tpu_custom_call.1']
    #allocation4 [shape = 's32[2]{0}', space=sflag, size = 0x8, scoped, tag = 'scoped memory for tpu_custom_call.1']
    #allocation5 [shape = 'u8[32768]{0}', space=vmem, size = 0x8000, scoped, tag = 'input window, operand 2, single buffered']
    #allocation6 [shape = 's32[1]{0}', space=sflag, size = 0x4, scoped, tag = 'scoped memory for tpu_custom_call.1']
    #allocation7 [shape = 'u8[32768]{0}', space=vmem, size = 0x8000, scoped, tag = 'input window, operand 3, single buffered']
    #allocation8 [shape = 'u8[65536]{0}', space=vmem, size = 0x10000, scoped, tag = 'output window, operand 0']
    %9 = vsyncpa [#allocation3], 0
    %10 = vsyncpa [#allocation6], 0
    %11 = vsyncpa [#allocation4], 0
    %s12 = scalar_lea.sflag [#allocation4], 1
    %13 = vsyncpa %s12, 0
    loop: start=0, step=1, limit=4
    $region2: #{tpu_custom_call.1} parent=1 // loop_pre_header
      _
    $region3: #{tpu_custom_call.1} parent=1 // loop_header
      %s15 = sphi 0, %s19
      %p16 = scmp.ge.s32.totalorder %s15, 4
      %s23 = sphi 0, %s23
      %s25 = sphi 0, %s23
      %s26 = sphi 0, %s25
      %s40 = sphi 0, %s26
      %s44 = sphi 0, %s44
      %s46 = sphi 0, %s44
      %s47 = sphi 0, %s46
      %s61 = sphi 0, %s47
      %s65 = sphi 0, %s65
      %s67 = sphi 0, %s65
      %s68 = sphi 0, %s67
      %s82 = sphi 0, %s68
      %s86 = sphi 0, %s86
      %s88 = sphi 0, %s86
      %s89 = sphi 0, %s88
      %s103 = sphi 0, %s89
      %s109 = sphi 0, %s111
      %s112 = sphi 0, %s109
      %s113 = sphi 0, %s112
      %s129 = sphi 0, %s113
    $region4: #{tpu_custom_call.1} parent=1 // loop_header_branch
      %18 = sbr.rel (%p16) target = $region8
    $region5: #{tpu_custom_call.1} parent=1 // loop_body
      %s20 = ssub.s32 %s15, 1
      %s21 = ssub.s32 %s15, 2
      %s22 = sadd.s32 %s15, 1
      %s24 = sadd.s32 %s23, 1
      %p27 = scmp.eq.s32.totalorder %s15, 1
      %p28 = scmp.ne.s32.totalorder %s23, %s25
      %p29 = scmp.eq.s32.totalorder %s15, 0
      %p30 = por %p28, %p29
      %p31 = scmp.ne.s32.totalorder %s23, %s25
      %p32 = scmp.eq.s32.totalorder %s20, 1
      %p33 = por %p31, %p32
      %p34 = scmp.ne.s32.totalorder %s25, %s26
      %p35 = scmp.eq.s32.totalorder %s20, 0
      %p36 = por %p34, %p35
      %p37 = scmp.ne.s32.totalorder %s25, %s26
      %p38 = scmp.eq.s32.totalorder %s21, 1
      %p39 = por %p37, %p38
      %p41 = scmp.ne.s32.totalorder %s26, %s40
      %p42 = scmp.eq.s32.totalorder %s21, 0
      %p43 = por %p41, %p42
      %s45 = sadd.s32 %s44, 1
      %p48 = scmp.eq.s32.totalorder %s15, 1
      %p49 = scmp.ne.s32.totalorder %s44, %s46
      %p50 = scmp.eq.s32.totalorder %s15, 0
      %p51 = por %p49, %p50
      %p52 = scmp.ne.s32.totalorder %s44, %s46
      %p53 = scmp.eq.s32.totalorder %s20, 1
      %p54 = por %p52, %p53
      %p55 = scmp.ne.s32.totalorder %s46, %s47
      %p56 = scmp.eq.s32.totalorder %s20, 0
      %p57 = por %p55, %p56
      %p58 = scmp.ne.s32.totalorder %s46, %s47
      %p59 = scmp.eq.s32.totalorder %s21, 1
      %p60 = por %p58, %p59
      %p62 = scmp.ne.s32.totalorder %s47, %s61
      %p63 = scmp.eq.s32.totalorder %s21, 0
      %p64 = por %p62, %p63
      %s66 = sadd.s32 %s65, 1
      %p69 = scmp.eq.s32.totalorder %s15, 1
      %p70 = scmp.ne.s32.totalorder %s65, %s67
      %p71 = scmp.eq.s32.totalorder %s15, 0
      %p72 = por %p70, %p71
      %p73 = scmp.ne.s32.totalorder %s65, %s67
      %p74 = scmp.eq.s32.totalorder %s20, 1
      %p75 = por %p73, %p74
      %p76 = scmp.ne.s32.totalorder %s67, %s68
      %p77 = scmp.eq.s32.totalorder %s20, 0
      %p78 = por %p76, %p77
      %p79 = scmp.ne.s32.totalorder %s67, %s68
      %p80 = scmp.eq.s32.totalorder %s21, 1
      %p81 = por %p79, %p80
      %p83 = scmp.ne.s32.totalorder %s68, %s82
      %p84 = scmp.eq.s32.totalorder %s21, 0
      %p85 = por %p83, %p84
      %s87 = sadd.s32 %s86, 1
      %p90 = scmp.eq.s32.totalorder %s15, 1
      %p91 = scmp.ne.s32.totalorder %s86, %s88
      %p92 = scmp.eq.s32.totalorder %s15, 0
      %p93 = por %p91, %p92
      %p94 = scmp.ne.s32.totalorder %s86, %s88
      %p95 = scmp.eq.s32.totalorder %s20, 1
      %p96 = por %p94, %p95
      %p97 = scmp.ne.s32.totalorder %s88, %s89
      %p98 = scmp.eq.s32.totalorder %s20, 0
      %p99 = por %p97, %p98
      %p100 = scmp.ne.s32.totalorder %s88, %s89
      %p101 = scmp.eq.s32.totalorder %s21, 1
      %p102 = por %p100, %p101
      %p104 = scmp.ne.s32.totalorder %s89, %s103
      %p105 = scmp.eq.s32.totalorder %s21, 0
      %p106 = por %p104, %p105
      %s107 = ssub.s32 %s15, %s22
      %p108 = scmp.eq.s32.totalorder %s107, 0
      %s110 = sadd.s32 %s109, 1
      %s111 = scalar_select %p108, %s109, %s110
      %p114 = pneg %p108
      %p115 = scmp.eq.s32.totalorder %s15, 1
      %p116 = por %p114, %p115
      %p117 = scmp.ne.s32.totalorder %s109, %s112
      %p118 = scmp.eq.s32.totalorder %s15, 0
      %p119 = por %p117, %p118
      %p120 = scmp.ne.s32.totalorder %s109, %s112
      %p121 = scmp.eq.s32.totalorder %s20, 1
      %p122 = por %p120, %p121
      %p123 = scmp.ne.s32.totalorder %s112, %s113
      %p124 = scmp.eq.s32.totalorder %s20, 0
      %p125 = por %p123, %p124
      %p126 = scmp.ne.s32.totalorder %s112, %s113
      %p127 = scmp.eq.s32.totalorder %s21, 1
      %p128 = por %p126, %p127
      %p130 = scmp.ne.s32.totalorder %s113, %s129
      %p131 = scmp.eq.s32.totalorder %s21, 0
      %p132 = por %p130, %p131
      %p133 = scmp.le.s32.totalorder 1, %s15
      %p134 = scmp.lt.s32.totalorder %s15, 3
      %p135 = pnand %p133, %p134
      %p136 = pneg %p135
      // Predicated region
      $region9: #{tpu_custom_call.1} parent=5 // pred_check
        _
      $region10: #{tpu_custom_call.1} parent=5 // pred_check_branch
        %138 = sbr.rel (%p135) target = $region12
      $region11: #{tpu_custom_call.1} parent=5 // pred_region
        %s139 = ssub.s32 %s15, 1
        // Predicated region
        $region13: #{tpu_custom_call.1} parent=11 // pred_check
          %p140 = pneg %p36
        $region14: #{tpu_custom_call.1} parent=11 // pred_check_branch
          %142 = sbr.rel (%p140) target = $region16
        $region15: #{tpu_custom_call.1} parent=11 // pred_region
          %s144 = ssub.s32 16, 16
          %145 = vsyncadd [#allocation3], %s144
          %s147 = sshll.u32 [#allocation2], 4
          %s148 = int_to_ptr.vmem [resolvable:$true] %s147
          %150 = dma.hbm_to_vmem [thread:$0]  %s0, 16, %s148, [#allocation3]
        $region16: #{tpu_custom_call.1} parent=11 // pred_fallthru
          _
        // Predicated region
        $region17: #{tpu_custom_call.1} parent=11 // pred_check
          %p151 = pneg %p57
        $region18: #{tpu_custom_call.1} parent=11 // pred_check_branch
          %153 = sbr.rel (%p151) target = $region20
        $region19: #{tpu_custom_call.1} parent=11 // pred_region
          _
        $region20: #{tpu_custom_call.1} parent=11 // pred_fallthru
          _
        // Predicated region
        $region21: #{tpu_custom_call.1} parent=11 // pred_check
          %p154 = pneg %p78
        $region22: #{tpu_custom_call.1} parent=11 // pred_check_branch
          %156 = sbr.rel (%p154) target = $region24
        $region23: #{tpu_custom_call.1} parent=11 // pred_region
          %s158 = ssub.s32 1024, 1024
          %159 = vsyncadd [#allocation6], %s158
          %s160 = sshll.u32 [#allocation5], 4
          %s161 = int_to_ptr.vmem [resolvable:$true] %s160
          %166 = dma.hbm_to_vmem [thread:$0]  %s2, 1024, %s161, [#allocation6], 128, 128, 8
        $region24: #{tpu_custom_call.1} parent=11 // pred_fallthru
          _
        // Predicated region
        $region25: #{tpu_custom_call.1} parent=11 // pred_check
          %p167 = pneg %p99
        $region26: #{tpu_custom_call.1} parent=11 // pred_check_branch
          %169 = sbr.rel (%p167) target = $region28
        $region27: #{tpu_custom_call.1} parent=11 // pred_region
          %s171 = ssub.s32 1024, 1024
          %172 = vsyncadd [#allocation6], %s171
          %s173 = sshll.u32 [#allocation7], 4
          %s174 = int_to_ptr.vmem [resolvable:$true] %s173
          %179 = dma.hbm_to_vmem [thread:$0]  %s3, 1024, %s174, [#allocation6], 128, 128, 8
        $region28: #{tpu_custom_call.1} parent=11 // pred_fallthru
          _
      $region12: #{tpu_custom_call.1} parent=5 // pred_fallthru
        _
      %p180 = scmp.lt.s32.totalorder %s15, 2
      // Predicated region
      $region29: #{tpu_custom_call.1} parent=5 // pred_check
        %p181 = pneg %p180
      $region30: #{tpu_custom_call.1} parent=5 // pred_check_branch
        %183 = sbr.rel (%p181) target = $region32
      $region31: #{tpu_custom_call.1} parent=5 // pred_region
        _
      $region32: #{tpu_custom_call.1} parent=5 // pred_fallthru
        _
      %p184 = scmp.le.s32.totalorder 1, %s15
      %p185 = scmp.lt.s32.totalorder %s15, 3
      %p186 = pnand %p184, %p185
      %p187 = pneg %p186
      // Predicated region
      $region33: #{tpu_custom_call.1} parent=5 // pred_check
        _
      $region34: #{tpu_custom_call.1} parent=5 // pred_check_branch
        %189 = sbr.rel (%p186) target = $region36
      $region35: #{tpu_custom_call.1} parent=5 // pred_region
        %s190 = ssub.s32 %s15, 1
        // Predicated region
        $region37: #{tpu_custom_call.1} parent=35 // pred_check
          %p191 = pneg %p36
        $region38: #{tpu_custom_call.1} parent=35 // pred_check_branch
          %193 = sbr.rel (%p191) target = $region40
        $region39: #{tpu_custom_call.1} parent=35 // pred_region
          %194 = dma.done [#allocation3], 16
        $region40: #{tpu_custom_call.1} parent=35 // pred_fallthru
          _
        // Predicated region
        $region41: #{tpu_custom_call.1} parent=35 // pred_check
          %p195 = pneg %p78
        $region42: #{tpu_custom_call.1} parent=35 // pred_check_branch
          %197 = sbr.rel (%p195) target = $region44
        $region43: #{tpu_custom_call.1} parent=35 // pred_region
          %198 = dma.done [#allocation6], 1024
        $region44: #{tpu_custom_call.1} parent=35 // pred_fallthru
          _
        // Predicated region
        $region45: #{tpu_custom_call.1} parent=35 // pred_check
          %p199 = pneg %p99
        $region46: #{tpu_custom_call.1} parent=35 // pred_check_branch
          %201 = sbr.rel (%p199) target = $region48
        $region47: #{tpu_custom_call.1} parent=35 // pred_region
          %202 = dma.done [#allocation6], 1024
        $region48: #{tpu_custom_call.1} parent=35 // pred_fallthru
          _
        %p203 = pneg %p36
        %p204 = pneg %p33
        %p205 = pneg %p57
        %p206 = pneg %p54
        %p207 = pneg %p78
        %p208 = pneg %p75
        %p209 = pneg %p99
        %p210 = pneg %p96
        %p211 = pneg %p125
        %p212 = pneg %p122
        %s213 = sand.u32 %s112, 1
        %s214 = scalar_lea.sflag [#allocation4], %s213
        %s215 = sand.u32 %s112, 1
        %s216 = smul.addr %s215, 64
        %s217 = scalar_lea.vmem [#allocation8], %s216
        %s218 = smul.u32 8, %s20
        %s219 = smul.u32 %s20, 256
        %s220 = scvt.s32.f32 %s219
        %v221 = vld [vmem:[#allocation2] sm:$0x1]
        %v222 = vstv %s220
        %v223 = vmul.f32 %v222, %v221
        %v224 = vand.u32 2147483647, %v223
        %vm225 = vcmp.le.f32.partialorder %v224, 0.7853982
        %vm226 = vcmp.lt.s32.totalorder %v223, 0
        %v227 = vand.u32 %v223, 2139095040
        %v228 = vshrl.u32 %v227, 23
        %v229 = vsub.s32 %v228, 127
        %v230 = vand.u32 2147483647, %v223
        %v231 = vand.u32 %v230, 8388607
        %v232 = vor.u32 %v231, 8388608
        %v233 = vsub.s32 0, %v232
        %v234 = vadd.s32 %v229, 1
        %vm235 = vcmp.gt.s32.totalorder %v234, 0
        %v236 = vsel %vm235, %v234, 0
        %v237 = vshrl.u32 %v236, 5
        %v238 = vand.u32 %v236, 31
        %v239 = vsub.s32 32, %v238
        %v240 = vshrl.u32 683565275, %v239
        %v241 = vshll.u32 683565275, %v238
        %v242 = vshrl.u32 2475754826, %v239
        %v243 = vor.u32 %v241, %v242
        %v244 = vshll.u32 2475754826, %v238
        %v245 = vshrl.u32 2131351028, %v239
        %v246 = vor.u32 %v244, %v245
        %v247 = vshll.u32 2131351028, %v238
        %v248 = vshrl.u32 2102212464, %v239
        %v249 = vor.u32 %v247, %v248
        %v250 = vshll.u32 2102212464, %v238
        %v251 = vshrl.u32 920167782, %v239
        %v252 = vor.u32 %v250, %v251
        %v253 = vshll.u32 920167782, %v238
        %v254 = vshrl.u32 1326507024, %v239
        %v255 = vor.u32 %v253, %v254
        %vm256 = vcmp.lt.s32.totalorder %v237, 1
        %vm257 = vcmp.lt.s32.totalorder %v237, 2
        %vm258 = vcmp.lt.s32.totalorder %v237, 3
        %vm259 = vcmp.lt.s32.totalorder %v237, 4
        %v260 = vsel %vm256, %v240, %v243
        %v261 = vsel %vm259, %v249, 2102212464
        %v262 = vsel %vm258, %v246, %v261
        %v263 = vsel %vm257, %v260, %v262
        %v264 = vsel %vm256, %v243, %v246
        %v265 = vsel %vm259, %v252, 920167782
        %v266 = vsel %vm258, %v249, %v265
        %v267 = vsel %vm257, %v264, %v266
        %v268 = vsel %vm256, %v246, %v249
        %v269 = vsel %vm259, %v255, 1326507024
        %v270 = vsel %vm258, %v252, %v269
        %v271 = vsel %vm257, %v268, %v270
        %v272 = vshll.u32 %v232, 8
        %v273 = vmul.u32.u64.compose %v272, %v271
        %v274 = vextract.low.u32 %v273
        %v275 = vextract.high.u32 %v273
        %v276 = vmul.u32.u64.compose %v272, %v267
        %v277 = vextract.low.u32 %v276
        %v278 = vextract.high.u32 %v276
        %v279 = vmul.u32 %v272, %v263
        %v280 = vadd.s32 %v275, %v277
        %vm281 = vc.u32 %v275, %v277
        %v282 = vadd.s32 %v278, 1
        %v283 = vsel %vm281, %v282, %v278
        %v284 = vadd.s32 %v279, %v283
        %v285 = vadd.s32 %v284, 536870912
        %v286 = vshrl.u32 %v285, 30
        %v287 = vshll.u32 %v286, 30
        %v288 = vsub.s32 %v284, %v287
        %vm289 = vcmp.lt.s32.totalorder %v288, 0
        %v290 = vsub.s32 0, %v288
        %v291 = vsel %vm289, %v290, %v288
        %v292 = vclz %v291
        %v293 = vsub.s32 %v292, 2
        %vm294 = vcmp.gt.s32.totalorder 0, %v293
        %v295 = vsel %vm294, 0, %v293
        %v296 = vsub.s32 32, %v295
        %v297 = vshll.u32 %v288, %v295
        %v298 = vshrl.u32 %v280, %v296
        %v299 = vor.u32 %v297, %v298
        %v300 = vsub.s32 4294967266, %v295
        %v301 = vadd.s32 %v300, 127
        %v302 = vshll.u32 %v301, 23
        %v303 = vor.u32 4788187, %v302
        %v304 = vand.u32 2147483647, %v303
        %v306 = vcvt.s32.f32 %v299
        %v307 = vmul.f32 %v306, %v304
        %v308 = vxor.u32 %v307, 2147483648
        %v309 = vsel %vm226, %v308, %v307
        %v310 = vsub.s32 4, %v286
        %v311 = vsel %vm226, %v310, %v286
        %v312 = vsel %vm225, %v223, %v309
        %v313 = vsel %vm225, 0, %v311
        %v314 = vcosq.f32.pop %v312
        %v315 = vsinq.f32.pop %v312
        %vm316 = vweird.f32 %v223
        %v317 = vadd.s32 %v313, 3
        %v318 = vand.u32 %v317, 3
        %vm319 = vcmp.lt.s32.totalorder %v318, 2
        %vm320 = vcmp.eq.s32.totalorder %v318, 0
        %v321 = vxor.u32 %v315, 2147483648
        %v322 = vsel %vm320, %v314, %v321
        %vm323 = vcmp.eq.s32.totalorder %v318, 2
        %v324 = vxor.u32 %v314, 2147483648
        %v325 = vsel %vm323, %v324, %v315
        %v326 = vsel %vm319, %v322, %v325
        %v327 = vsel %vm316, nan, %v326
        %v328 = vand.u32 2147483647, %v223
        %vm329 = vcmp.le.f32.partialorder %v328, 0.7853982
        %vm330 = vcmp.lt.s32.totalorder %v223, 0
        %v331 = vand.u32 %v223, 2139095040
        %v332 = vshrl.u32 %v331, 23
        %v333 = vsub.s32 %v332, 127
        %v334 = vand.u32 2147483647, %v223
        %v335 = vand.u32 %v334, 8388607
        %v336 = vor.u32 %v335, 8388608
        %v337 = vsub.s32 0, %v336
        %v338 = vadd.s32 %v333, 1
        %vm339 = vcmp.gt.s32.totalorder %v338, 0
        %v340 = vsel %vm339, %v338, 0
        %v341 = vshrl.u32 %v340, 5
        %v342 = vand.u32 %v340, 31
        %v343 = vsub.s32 32, %v342
        %v344 = vshrl.u32 683565275, %v343
        %v345 = vshll.u32 683565275, %v342
        %v346 = vshrl.u32 2475754826, %v343
        %v347 = vor.u32 %v345, %v346
        %v348 = vshll.u32 2475754826, %v342
        %v349 = vshrl.u32 2131351028, %v343
        %v350 = vor.u32 %v348, %v349
        %v351 = vshll.u32 2131351028, %v342
        %v352 = vshrl.u32 2102212464, %v343
        %v353 = vor.u32 %v351, %v352
        %v354 = vshll.u32 2102212464, %v342
        %v355 = vshrl.u32 920167782, %v343
        %v356 = vor.u32 %v354, %v355
        %v357 = vshll.u32 920167782, %v342
        %v358 = vshrl.u32 1326507024, %v343
        %v359 = vor.u32 %v357, %v358
        %vm360 = vcmp.lt.s32.totalorder %v341, 1
        %vm361 = vcmp.lt.s32.totalorder %v341, 2
        %vm362 = vcmp.lt.s32.totalorder %v341, 3
        %vm363 = vcmp.lt.s32.totalorder %v341, 4
        %v364 = vsel %vm360, %v344, %v347
        %v365 = vsel %vm363, %v353, 2102212464
        %v366 = vsel %vm362, %v350, %v365
        %v367 = vsel %vm361, %v364, %v366
        %v368 = vsel %vm360, %v347, %v350
        %v369 = vsel %vm363, %v356, 920167782
        %v370 = vsel %vm362, %v353, %v369
        %v371 = vsel %vm361, %v368, %v370
        %v372 = vsel %vm360, %v350, %v353
        %v373 = vsel %vm363, %v359, 1326507024
        %v374 = vsel %vm362, %v356, %v373
        %v375 = vsel %vm361, %v372, %v374
        %v376 = vshll.u32 %v336, 8
        %v377 = vmul.u32.u64.compose %v376, %v375
        %v378 = vextract.low.u32 %v377
        %v379 = vextract.high.u32 %v377
        %v380 = vmul.u32.u64.compose %v376, %v371
        %v381 = vextract.low.u32 %v380
        %v382 = vextract.high.u32 %v380
        %v383 = vmul.u32 %v376, %v367
        %v384 = vadd.s32 %v379, %v381
        %vm385 = vc.u32 %v379, %v381
        %v386 = vadd.s32 %v382, 1
        %v387 = vsel %vm385, %v386, %v382
        %v388 = vadd.s32 %v383, %v387
        %v389 = vadd.s32 %v388, 536870912
        %v390 = vshrl.u32 %v389, 30
        %v391 = vshll.u32 %v390, 30
        %v392 = vsub.s32 %v388, %v391
        %vm393 = vcmp.lt.s32.totalorder %v392, 0
        %v394 = vsub.s32 0, %v392
        %v395 = vsel %vm393, %v394, %v392
        %v396 = vclz %v395
        %v397 = vsub.s32 %v396, 2
        %vm398 = vcmp.gt.s32.totalorder 0, %v397
        %v399 = vsel %vm398, 0, %v397
        %v400 = vsub.s32 32, %v399
        %v401 = vshll.u32 %v392, %v399
        %v402 = vshrl.u32 %v384, %v400
        %v403 = vor.u32 %v401, %v402
        %v404 = vsub.s32 4294967266, %v399
        %v405 = vadd.s32 %v404, 127
        %v406 = vshll.u32 %v405, 23
        %v407 = vor.u32 4788187, %v406
        %v408 = vand.u32 2147483647, %v407
        %v410 = vcvt.s32.f32 %v403
        %v411 = vmul.f32 %v410, %v408
        %v412 = vxor.u32 %v411, 2147483648
        %v413 = vsel %vm330, %v412, %v411
        %v414 = vsub.s32 4, %v390
        %v415 = vsel %vm330, %v414, %v390
        %v416 = vsel %vm329, %v223, %v413
        %v417 = vsel %vm329, 0, %v415
        %v418 = vcosq.f32.pop %v416
        %v419 = vsinq.f32.pop %v416
        %vm420 = vweird.f32 %v223
        %v421 = vand.u32 %v417, 3
        %vm422 = vcmp.lt.s32.totalorder %v421, 2
        %vm423 = vcmp.eq.s32.totalorder %v421, 0
        %v424 = vxor.u32 %v419, 2147483648
        %v425 = vsel %vm423, %v418, %v424
        %vm426 = vcmp.eq.s32.totalorder %v421, 2
        %v427 = vxor.u32 %v418, 2147483648
        %v428 = vsel %vm426, %v427, %v419
        %v429 = vsel %vm422, %v425, %v428
        %v430 = vsel %vm420, nan, %v429
        %v431 = vld [vmem:[%s1] sm:$0x1]
        %v432 = vsub.f32 %v430, %v327
        %v433 = vmul.f32 %v431, %v432
        %v434 = vadd.f32 %v327, %v433
        %v435 = vadd.f32 %v430, %v327
        %v436 = vmul.f32 %v431, %v435
        %v437 = vsub.f32 %v430, %v436
        %v438 = vld [vmem:[#allocation7] sm:$0xff]
        %v439 = vld [vmem:[#allocation7 + $0x8] sm:$0xff]
        %v440 = vld [vmem:[#allocation7 + $0x10] sm:$0xff]
        %v441 = vld [vmem:[#allocation7 + $0x18] sm:$0xff]
        %v442 = vld [vmem:[#allocation7 + $0x20] sm:$0xff]
        %v443 = vld [vmem:[#allocation7 + $0x28] sm:$0xff]
        %v444 = vld [vmem:[#allocation7 + $0x30] sm:$0xff]
        %v445 = vld [vmem:[#allocation7 + $0x38] sm:$0xff]
        %v447 = vlaneseq
        %v448 = vshrl.u32 %v447, 7
        %v449 = vsub.s32 0, %v448
        %v450 = vrot.slane %v434, %v449
        %v452 = vmul.f32 %v450, %v438
        %v453 = vmul.f32 %v450, %v439
        %v454 = vmul.f32 %v450, %v440
        %v455 = vmul.f32 %v450, %v441
        %v456 = vmul.f32 %v450, %v442
        %v457 = vmul.f32 %v450, %v443
        %v458 = vmul.f32 %v450, %v444
        %v459 = vmul.f32 %v450, %v445
        %v460 = vld [vmem:[#allocation5] sm:$0xff]
        %v461 = vld [vmem:[#allocation5 + $0x8] sm:$0xff]
        %v462 = vld [vmem:[#allocation5 + $0x10] sm:$0xff]
        %v463 = vld [vmem:[#allocation5 + $0x18] sm:$0xff]
        %v464 = vld [vmem:[#allocation5 + $0x20] sm:$0xff]
        %v465 = vld [vmem:[#allocation5 + $0x28] sm:$0xff]
        %v466 = vld [vmem:[#allocation5 + $0x30] sm:$0xff]
        %v467 = vld [vmem:[#allocation5 + $0x38] sm:$0xff]
        %v469 = vlaneseq
        %v470 = vshrl.u32 %v469, 7
        %v471 = vsub.s32 0, %v470
        %v472 = vrot.slane %v437, %v471
        %v474 = vmul.f32 %v472, %v460
        %v475 = vmul.f32 %v472, %v461
        %v476 = vmul.f32 %v472, %v462
        %v477 = vmul.f32 %v472, %v463
        %v478 = vmul.f32 %v472, %v464
        %v479 = vmul.f32 %v472, %v465
        %v480 = vmul.f32 %v472, %v466
        %v481 = vmul.f32 %v472, %v467
        %v482 = vadd.f32 %v452, %v474
        %v483 = vadd.f32 %v453, %v475
        %v484 = vadd.f32 %v454, %v476
        %v485 = vadd.f32 %v455, %v477
        %v486 = vadd.f32 %v456, %v478
        %v487 = vadd.f32 %v457, %v479
        %v488 = vadd.f32 %v458, %v480
        %v489 = vadd.f32 %v459, %v481
        %490 = vst [vmem:[%s217] sm:$0xff] %v482
        %491 = vst [vmem:[%s217 + $0x8] sm:$0xff] %v483
        %492 = vst [vmem:[%s217 + $0x10] sm:$0xff] %v484
        %493 = vst [vmem:[%s217 + $0x18] sm:$0xff] %v485
        %494 = vst [vmem:[%s217 + $0x20] sm:$0xff] %v486
        %495 = vst [vmem:[%s217 + $0x28] sm:$0xff] %v487
        %496 = vst [vmem:[%s217 + $0x30] sm:$0xff] %v488
        %497 = vst [vmem:[%s217 + $0x38] sm:$0xff] %v489
        %s498 = sand.u32 %s112, 1
        %s499 = scalar_lea.sflag [#allocation4], %s498
        %s500 = sand.u32 %s112, 1
        %s501 = smul.addr %s500, 64
        %s502 = scalar_lea.vmem [#allocation8], %s501
        // Predicated region
        $region49: #{tpu_custom_call.1} parent=35 // pred_check
          %p503 = pneg %p122
        $region50: #{tpu_custom_call.1} parent=35 // pred_check_branch
          %505 = sbr.rel (%p503) target = $region52
        $region51: #{tpu_custom_call.1} parent=35 // pred_region
          %s506 = smul.u32 8, %s20
          %s508 = ssub.s32 1024, 1024
          %509 = vsyncadd %s499, %s508
          %s510 = smul.addr %s506, 128
          %s511 = scalar_lea.hbm %s4, %s510
          %s512 = sshll.u32 %s502, 4
          %s513 = int_to_ptr.vmem [resolvable:$true] %s512
          %518 = dma.vmem_to_hbm [thread:$0]  %s513, 1024, %s511, %s499, 128, 128, 8
        $region52: #{tpu_custom_call.1} parent=35 // pred_fallthru
          _
      $region36: #{tpu_custom_call.1} parent=5 // pred_fallthru
        _
      %p519 = scmp.le.s32.totalorder 2, %s15
      // Predicated region
      $region53: #{tpu_custom_call.1} parent=5 // pred_check
        %p520 = pneg %p519
      $region54: #{tpu_custom_call.1} parent=5 // pred_check_branch
        %522 = sbr.rel (%p520) target = $region56
      $region55: #{tpu_custom_call.1} parent=5 // pred_region
        %s523 = ssub.s32 %s15, 2
        // Predicated region
        $region57: #{tpu_custom_call.1} parent=55 // pred_check
          %p524 = pneg %p128
        $region58: #{tpu_custom_call.1} parent=55 // pred_check_branch
          %526 = sbr.rel (%p524) target = $region60
        $region59: #{tpu_custom_call.1} parent=55 // pred_region
          %s527 = sand.u32 %s113, 1
          %s528 = scalar_lea.sflag [#allocation4], %s527
          %s529 = sand.u32 %s113, 1
          %s530 = smul.addr %s529, 64
          %s531 = scalar_lea.vmem [#allocation8], %s530
          %532 = dma.done %s528, 1024
        $region60: #{tpu_custom_call.1} parent=55 // pred_fallthru
          _
      $region56: #{tpu_custom_call.1} parent=5 // pred_fallthru
        _
    $region6: #{tpu_custom_call.1} parent=1 // loop_footer
      %s19 = sadd.s32 1, %s15
    $region7: #{tpu_custom_call.1} parent=1 // loop_footer_branch
      %14 = sbr.rel target = $region3
    $region8: #{tpu_custom_call.1} parent=1 // loop_exit
      _
    %533 = vsyncpa [#allocation3], 1
    %s534 = scalar_lea.sflag [#allocation3], 1
    %535 = vsyncpa %s534, 1
    %536 = vsyncpa [#allocation6], 1
    %537 = vsyncpa [#allocation4], 1
    %s538 = scalar_lea.sflag [#allocation4], 1
    %539 = vsyncpa %s538, 1

</llo_original>
